<compile_context>
chip_gen: v6e
topology: v6e:2x2x1
jax: 0.10.0
libtpu: 0.0.40
codegen_flags: <defaults>
</compile_context>

<pallas_src>
import math
import jax
import jax.numpy as jnp
from jax.experimental import pallas as pl
from jax.experimental.pallas import tpu as pltpu


def _round_up(x, m):
    return ((x + m - 1) // m) * m


def _sublane_multiple(dtype):
    # Min second-minor tile: 8 for f32, 16 for bf16/f16, 32 for int8/fp8.
    return max(8, 32 // jnp.dtype(dtype).itemsize)


def _vmem_capacity_bytes():
    try:
        cap = int(pltpu.get_tpu_info().vmem_capacity_bytes)
    except Exception:
        cap = 64 << 20  # conservative: v7x per-TensorCore VMEM
    return max(cap, 64 << 20)


# ----------------------------- kernels ------------------------------------


def _mlp_kernel_f32(x_ref, w_ref, o_ref):
    # K-innermost reduction; the output block index is K-invariant, so o_ref
    # stays VMEM-resident across the reduction and acts as the f32 accumulator.
    @pl.when(pl.program_id(2) == 0)
    def _():
        o_ref[...] = jnp.zeros_like(o_ref)

    o_ref[...] += jnp.dot(x_ref[...], w_ref[...],
                          preferred_element_type=jnp.float32)


def _mlp_kernel_lowp(x_ref, w_ref, o_ref, acc_ref):
    # Sub-32-bit output: accumulate in an f32 scratch, cast once on last step.
    @pl.when(pl.program_id(2) == 0)
    def _():
        acc_ref[...] = jnp.zeros_like(acc_ref)

    acc_ref[...] += jnp.dot(x_ref[...], w_ref[...],
                            preferred_element_type=jnp.float32)

    @pl.when(pl.program_id(2) == pl.num_programs(2) - 1)
    def _():
        o_ref[...] = acc_ref[...].astype(o_ref.dtype)


# ----------------------------- module -------------------------------------


class PallasMLP:
    """y = x @ W.T with one-time weight preparation (pad + transpose + cast)."""

    def __init__(self, W, *, use_bf16=False, tn=None, tk=None, tm_cap=512):
        self.out_features, self.in_features = W.shape
        self.compute_dtype = jnp.dtype(jnp.bfloat16) if use_bf16 else jnp.dtype(W.dtype)
        self.tm_cap = int(tm_cap)

        in_bytes = self.compute_dtype.itemsize
        cap = _vmem_capacity_bytes()
        self.vmem_budget = int(cap * 0.70)
        self.vmem_limit = min(int(cap * 0.85), cap - (4 << 20))

        N, K = self.out_features, self.in_features
        Np0 = _round_up(N, 128)
        Kp0 = _round_up(K, 128)

        # Lane-dense tile defaults, bounded by the VMEM budget below.
        tn = _round_up(tn, 128) if tn is not None else min(Np0, 2048)
        tk = _round_up(tk, 128) if tk is not None else min(Kp0, 1024)

        # Shrink tn, then tk, until the worst-case double-buffered footprint
        # (x 2-deep, W up to 3-deep, out 2-deep, f32 scratch) fits the budget.
        def footprint(tm_, tn_, tk_):
            return (2 * tm_ * tk_ * in_bytes
                    + 3 * tk_ * tn_ * in_bytes
                    + 2 * tm_ * tn_ * 4
                    + tm_ * tn_ * 4)

        while footprint(self.tm_cap, tn, tk) > self.vmem_budget and tn > 128:
            tn = max(128, _round_up(tn // 2, 128))
        while footprint(self.tm_cap, tn, tk) > self.vmem_budget and tk > 128:
            tk = max(128, _round_up(tk // 2, 128))

        self.tn, self.tk = tn, tk
        self.Np = _round_up(N, tn)
        self.Kp = _round_up(K, tk)

        # One-time weight prep (never repeated per call): pad ragged edges,
        # pre-transpose to (Kp, Np) so the kernel is a canonical (tm,tk)x(tk,tn)
        # dot (no per-tile XLU transpose stealing MXU-feed slots), and
        # optionally cast to bf16 (halves HBM bytes, native bf16 MXU rate).
        Wp = W
        if (self.Np, self.Kp) != (N, K):
            Wp = jnp.pad(Wp, ((0, self.Np - N), (0, self.Kp - K)))
        self.Wt = jnp.asarray(Wp.T, dtype=self.compute_dtype)  # (Kp, Np)

    def __call__(self, x, *, tm=None):
        B, K = x.shape
        assert K == self.in_features, (
            f"Wrong x size: in_features={self.in_features}, got {K}")

        out_dtype = x.dtype
        sub_m = max(_sublane_multiple(self.compute_dtype),
                    _sublane_multiple(out_dtype))
        if tm is None:
            tm = min(_round_up(B, sub_m), self.tm_cap)
        else:
            tm = _round_up(tm, sub_m)

        tn, tk, Np, Kp = self.tn, self.tk, self.Np, self.Kp
        Bp = _round_up(B, tm)

        # Megacore (v7x: 2 TensorCores): ensure a "parallel" axis has >= 2
        # blocks. If the batch fits one M block and N fits one tile, split N
        # into an exact divisor of Np (no extra padding / HBM traffic).
        if Bp // tm == 1 and Np // tn == 1:
            nb = Np // 128
            for q in range(nb // 2, 0, -1):
                if nb % q == 0:
                    tn = 128 * q
                    break

        xp = x.astype(self.compute_dtype)
        if (Bp, Kp) != (B, K):
            xp = jnp.pad(xp, ((0, Bp - B), (0, Kp - K)))

        grid_m, grid_n, grid_k = Bp // tm, Np // tn, Kp // tk
        grid = (grid_m, grid_n, grid_k)

        if out_dtype == jnp.float32:
            kernel = _mlp_kernel_f32
            scratch_shapes = []
        else:
            kernel = _mlp_kernel_lowp
            scratch_shapes = [pltpu.VMEM((tm, tn), jnp.float32)]

        # Decode-style shapes (pure weight streaming): deeper buffering on the
        # weight stream keeps HBM busy despite tiny per-step compute.
        w_spec_kwargs = {}
        if grid_m == 1 and grid_n == 1 and grid_k >= 3:
            w_spec_kwargs = dict(pipeline_mode=pl.Buffered(3))
        w_spec = pl.BlockSpec((tk, tn), lambda i, j, k: (k, j), **w_spec_kwargs)

        in_bytes = self.compute_dtype.itemsize
        out_bytes = jnp.dtype(out_dtype).itemsize
        cost = pl.CostEstimate(
            flops=2 * Bp * Np * Kp,
            transcendentals=0,
            bytes_accessed=(Bp * Kp * in_bytes * grid_n      # x re-read per N block
                            + Kp * Np * in_bytes * grid_m    # W re-read per M block
                            + Bp * Np * out_bytes),
        )

        y = pl.pallas_call(
            kernel,
            out_shape=jax.ShapeDtypeStruct((Bp, Np), out_dtype),
            grid_spec=pltpu.PrefetchScalarGridSpec(
                num_scalar_prefetch=0,
                grid=grid,
                in_specs=[
                    pl.BlockSpec((tm, tk), lambda i, j, k: (i, k)),  # x (M, K)
                    w_spec,                                          # Wt (K, N)
                ],
                out_specs=pl.BlockSpec((tm, tn), lambda i, j, k: (i, j)),
                scratch_shapes=scratch_shapes,
            ),
            compiler_params=pltpu.CompilerParams(
                dimension_semantics=("parallel", "parallel", "arbitrary"),
                vmem_limit_bytes=self.vmem_limit,
            ),
            cost_estimate=cost,
        )(xp, self.Wt)

        if (Bp, Np) != (B, self.out_features):
            y = y[:B, :self.out_features]
        return y


if __name__ == "__main__":
    key = jax.random.PRNGKey(0)
    k_x1, k_w1, k_x2, k_w2 = jax.random.split(key, 4)

    # ---- Test 1: module-sized shapes, exact f32 path ------------------------
    batch, in_features, out_features = 8, 32, 64
    bound = math.sqrt(1.0 / in_features)
    W1 = jax.random.uniform(k_w1, (out_features, in_features),
                            dtype=jnp.float32, minval=-bound, maxval=bound)
    x1 = jax.random.normal(k_x1, (batch, in_features), dtype=jnp.float32)

    mlp1 = PallasMLP(W1)                 # f32 compute: exact parity with module
    y1 = mlp1(x1)
    jax.block_until_ready(y1)
    y1_ref = x1 @ W1.T
    assert y1.shape == (batch, out_features)
    assert jnp.allclose(y1, y1_ref, atol=1e-5, rtol=1e-5)

    # ---- Test 2: ragged shapes, bf16 compute, multi-step grid (2,2,3) -------
    b2, k2, n2 = 24, 300, 200
    bound2 = math.sqrt(1.0 / k2)
    W2 = jax.random.uniform(k_w2, (n2, k2), dtype=jnp.float32,
                            minval=-bound2, maxval=bound2)
    x2 = jax.random.normal(k_x2, (b2, k2), dtype=jnp.float32)

    mlp2 = PallasMLP(W2, use_bf16=True, tn=128, tk=128)
    y2 = mlp2(x2, tm=16)                 # exercises the K-reduction accumulator
    jax.block_until_ready(y2)
    y2_ref = x2 @ W2.T
    assert y2.shape == (b2, n2)
    assert jnp.allclose(y2, y2_ref, atol=2e-2, rtol=2e-2)

    print("KERNEL_OK")
</pallas_src>

<mosaic_0001>
module attributes {stable_mosaic.version = 11 : i64} {
  func.func @_mlp_kernel_f32(%arg0: i32, %arg1: i32, %arg2: i32, %arg3: memref<8x128xf32, #tpu.memory_space<vmem>>, %arg4: memref<128x128xf32, #tpu.memory_space<vmem>>, %arg5: memref<8x128xf32, #tpu.memory_space<vmem>>) attributes {dimension_semantics = [#tpu.dimension_semantics<parallel>, #tpu.dimension_semantics<parallel>, #tpu.dimension_semantics<arbitrary>], iteration_bounds = array<i64: 1, 1, 1>, scalar_prefetch = 0 : i64, scratch_operands = 0 : i64, tpu.core_type = #tpu.core_type<tc>, window_params = [{transform_indices = @transform_0, window_bounds = array<i64: 8, 128>}, {transform_indices = @transform_1, window_bounds = array<i64: 128, 128>}, {transform_indices = @transform_2, window_bounds = array<i64: 8, 128>}]} {
    %c0_i32 = arith.constant 0 : i32
    %0 = arith.cmpi eq, %arg2, %c0_i32 : i32
    %1 = arith.extui %0 : i1 to i32
    %c0_i32_0 = arith.constant 0 : i32
    %2 = arith.cmpi ne, %1, %c0_i32_0 : i32
    scf.if %2 {
      %cst_8 = arith.constant 0.000000e+00 : f32
      %9 = vector.broadcast %cst_8 : f32 to vector<8x128xf32>
      %c0_9 = arith.constant 0 : index
      %c0_10 = arith.constant 0 : index
      %10 = vector.load %arg5[%c0_9, %c0_10] : memref<8x128xf32, #tpu.memory_space<vmem>>, vector<8x128xf32>
      tpu.vector_store %arg5[%c0_9, %c0_10], %9 {strides = array<i32>} : memref<8x128xf32, #tpu.memory_space<vmem>>, vector<8x128xf32>,
    } else {
    }
    %c0 = arith.constant 0 : index
    %c0_1 = arith.constant 0 : index
    %3 = vector.load %arg5[%c0, %c0_1] : memref<8x128xf32, #tpu.memory_space<vmem>>, vector<8x128xf32>
    %c0_2 = arith.constant 0 : index
    %c0_3 = arith.constant 0 : index
    %4 = vector.load %arg3[%c0_2, %c0_3] : memref<8x128xf32, #tpu.memory_space<vmem>>, vector<8x128xf32>
    %c0_4 = arith.constant 0 : index
    %c0_5 = arith.constant 0 : index
    %5 = vector.load %arg4[%c0_4, %c0_5] : memref<128x128xf32, #tpu.memory_space<vmem>>, vector<128x128xf32>
    %cst = arith.constant dense<0.000000e+00> : vector<8x128xf32>
    %6 = tpu.matmul %4, %5, %cst {dimension_numbers = #tpu.dot_dimension_numbers<[1], [0], [0], [1], [0, 0, 1, 1], [], []>} : vector<8x128xf32>, vector<128x128xf32>, vector<8x128xf32> -> vector<8x128xf32>
    %7 = arith.addf %3, %6 : vector<8x128xf32>
    %c0_6 = arith.constant 0 : index
    %c0_7 = arith.constant 0 : index
    %8 = vector.load %arg5[%c0_6, %c0_7] : memref<8x128xf32, #tpu.memory_space<vmem>>, vector<8x128xf32>
    tpu.vector_store %arg5[%c0_6, %c0_7], %7 {strides = array<i32>} : memref<8x128xf32, #tpu.memory_space<vmem>>, vector<8x128xf32>,
    return
  }
  func.func @transform_0(%arg0: i32, %arg1: i32, %arg2: i32) -> (i32, i32) {
    %c0_i32 = arith.constant 0 : i32
    return %arg0, %arg2 : i32, i32
  }
  func.func @transform_1(%arg0: i32, %arg1: i32, %arg2: i32) -> (i32, i32) {
    %c0_i32 = arith.constant 0 : i32
    return %arg2, %arg1 : i32, i32
  }
  func.func @transform_2(%arg0: i32, %arg1: i32, %arg2: i32) -> (i32, i32) {
    %c0_i32 = arith.constant 0 : i32
    return %arg0, %arg1 : i32, i32
  }
}

</mosaic_0001>

<llo_original>
// kernel: tpu_custom_call.1
$region0: #{tpu_custom_call.1}
  #allocation0 [shape = 'u32[]', space=smem, size = 0x4, offset = 0x4, fixed_abs, tag = 'smem constant byte address 0x4 - core index']
  #allocation1 [shape = 'u32[144,128]{1,0:T(1,128)}', space=vmem, size = 0x12000, scoped, tag = 'internal scratch']
  %s0 = inlined_call_operand.hbm [shape: f32[8,128], index: 0, kind: input, shape index: {}]
  %s1 = inlined_call_operand.hbm [shape: f32[128,128], index: 1, kind: input, shape index: {}]
  %s2 = inlined_call_operand.hbm [shape: f32[8,128], index: 2, kind: output, shape index: {}]
  %s3 = sld [smem:[#allocation0]]
  $region30: #{tpu_custom_call.1} parent=0
    _
  %s5 = ssub.s32 1, %s3
  %s6 = scalar_select 0, %s5, %s3
  $region1: #{tpu_custom_call.1} parent=0
    #allocation2 [shape = 'u8[4096]{0}', space=vmem, size = 0x1000, scoped, tag = 'input window, operand 0, single buffered']
    #allocation3 [shape = 's32[1]{0}', space=sflag, size = 0x4, scoped, tag = 'scoped memory for tpu_custom_call.1']
    #allocation4 [shape = 's32[1]{0}', space=sflag, size = 0x4, scoped, tag = 'scoped memory for tpu_custom_call.1']
    #allocation5 [shape = 'u8[65536]{0}', space=vmem, size = 0x10000, scoped, tag = 'input window, operand 1, single buffered']
    #allocation6 [shape = 's32[1]{0}', space=sflag, size = 0x4, scoped, tag = 'scoped memory for tpu_custom_call.1']
    #allocation7 [shape = 'u8[4096]{0}', space=vmem, size = 0x1000, scoped, tag = 'output window, operand 0, single buffered']
    %7 = vsyncpa [#allocation3], 0
    %8 = vsyncpa [#allocation6], 0
    %9 = vsyncpa [#allocation4], 0
    // Predicated region
    $region2: #{tpu_custom_call.1} parent=1 // pred_check
      _
    $region3: #{tpu_custom_call.1} parent=1 // pred_check_branch
      %11 = sbr.rel (0) target = $region5
    $region4: #{tpu_custom_call.1} parent=1 // pred_region
      %s13 = ssub.s32 128, 128
      %14 = vsyncadd [#allocation3], %s13
      %s16 = sshll.u32 [#allocation2], 4
      %s17 = int_to_ptr.vmem [resolvable:$true] %s16
      %19 = dma.hbm_to_vmem [thread:$0]  %s0, 128, %s17, [#allocation3]
    $region5: #{tpu_custom_call.1} parent=1 // pred_fallthru
      _
    // Predicated region
    $region6: #{tpu_custom_call.1} parent=1 // pred_check
      _
    $region7: #{tpu_custom_call.1} parent=1 // pred_check_branch
      %21 = sbr.rel (0) target = $region9
    $region8: #{tpu_custom_call.1} parent=1 // pred_region
      %s23 = ssub.s32 2048, 2048
      %24 = vsyncadd [#allocation6], %s23
      %s25 = sshll.u32 [#allocation5], 4
      %s26 = int_to_ptr.vmem [resolvable:$true] %s25
      %31 = dma.hbm_to_vmem [thread:$0]  %s1, 2048, %s26, [#allocation6], 128, 128, 8
    $region9: #{tpu_custom_call.1} parent=1 // pred_fallthru
      _
    // Predicated region
    $region10: #{tpu_custom_call.1} parent=1 // pred_check
      _
    $region11: #{tpu_custom_call.1} parent=1 // pred_check_branch
      %33 = sbr.rel (0) target = $region13
    $region12: #{tpu_custom_call.1} parent=1 // pred_region
      %34 = dma.done [#allocation3], 128
    $region13: #{tpu_custom_call.1} parent=1 // pred_fallthru
      _
    // Predicated region
    $region14: #{tpu_custom_call.1} parent=1 // pred_check
      _
    $region15: #{tpu_custom_call.1} parent=1 // pred_check_branch
      %36 = sbr.rel (0) target = $region17
    $region16: #{tpu_custom_call.1} parent=1 // pred_region
      %37 = dma.done [#allocation6], 2048
    $region17: #{tpu_custom_call.1} parent=1 // pred_fallthru
      _
    %p38 = scmp.eq.s32.totalorder 0, 0
    // Predicated region
    $region18: #{tpu_custom_call.1} parent=1 // pred_check
      %p39 = pneg %p38
    $region19: #{tpu_custom_call.1} parent=1 // pred_check_branch
      %41 = sbr.rel (%p39) target = $region21
    $region20: #{tpu_custom_call.1} parent=1 // pred_region
      %42 = vst [vmem:[#allocation7] sm:$0xff] 0.0
    $region21: #{tpu_custom_call.1} parent=1 // pred_fallthru
      _
    %v43 = vld [vmem:[#allocation7] sm:$0xff]
    %v44 = vld [vmem:[#allocation2] sm:$0xff]
    %v45 = vld [vmem:[#allocation5] sm:$0xff]
    %v46 = vld [vmem:[#allocation5 + $0x8] sm:$0xff]
    %v47 = vld [vmem:[#allocation5 + $0x10] sm:$0xff]
    %v48 = vld [vmem:[#allocation5 + $0x18] sm:$0xff]
    %v49 = vld [vmem:[#allocation5 + $0x20] sm:$0xff]
    %v50 = vld [vmem:[#allocation5 + $0x28] sm:$0xff]
    %v51 = vld [vmem:[#allocation5 + $0x30] sm:$0xff]
    %v52 = vld [vmem:[#allocation5 + $0x38] sm:$0xff]
    %v53 = vld [vmem:[#allocation5 + $0x40] sm:$0xff]
    %v54 = vld [vmem:[#allocation5 + $0x48] sm:$0xff]
    %v55 = vld [vmem:[#allocation5 + $0x50] sm:$0xff]
    %v56 = vld [vmem:[#allocation5 + $0x58] sm:$0xff]
    %v57 = vld [vmem:[#allocation5 + $0x60] sm:$0xff]
    %v58 = vld [vmem:[#allocation5 + $0x68] sm:$0xff]
    %v59 = vld [vmem:[#allocation5 + $0x70] sm:$0xff]
    %v60 = vld [vmem:[#allocation5 + $0x78] sm:$0xff]
    %61 = vmatprep.subr.mxu0 0.0
    %62 = vmatpush1.msra.mxu0 %v60
    %63 = vmatprep.subr.mxu0 0.0
    %64 = vmatpush1.msra.mxu0 %v59
    %65 = vmatprep.subr.mxu0 0.0
    %66 = vmatpush1.msra.mxu0 %v58
    %67 = vmatprep.subr.mxu0 0.0
    %68 = vmatpush1.msra.mxu0 %v57
    %69 = vmatprep.subr.mxu0 0.0
    %70 = vmatpush1.msra.mxu0 %v56
    %71 = vmatprep.subr.mxu0 0.0
    %72 = vmatpush1.msra.mxu0 %v55
    %73 = vmatprep.subr.mxu0 0.0
    %74 = vmatpush1.msra.mxu0 %v54
    %75 = vmatprep.subr.mxu0 0.0
    %76 = vmatpush1.msra.mxu0 %v53
    %77 = vmatprep.subr.mxu0 0.0
    %78 = vmatpush1.msra.mxu0 %v52
    %79 = vmatprep.subr.mxu0 0.0
    %80 = vmatpush1.msra.mxu0 %v51
    %81 = vmatprep.subr.mxu0 0.0
    %82 = vmatpush1.msra.mxu0 %v50
    %83 = vmatprep.subr.mxu0 0.0
    %84 = vmatpush1.msra.mxu0 %v49
    %85 = vmatprep.subr.mxu0 0.0
    %86 = vmatpush1.msra.mxu0 %v48
    %87 = vmatprep.subr.mxu0 0.0
    %88 = vmatpush1.msra.mxu0 %v47
    %89 = vmatprep.subr.mxu0 0.0
    %90 = vmatpush1.msra.mxu0 %v46
    %91 = vmatprep.subr.mxu0 0.0
    %92 = vmatpush1.msra.mxu0 %v45
    %93 = vmatprep.subr.mxu0 0.0
    %94 = vmatpush2.msra.mxu0 0.0
    %95 = vmatprep.subr.mxu0 0.0
    %96 = vmatpush2.msra.mxu0 0.0
    %97 = vmatprep.subr.mxu0 0.0
    %98 = vmatpush2.msra.mxu0 0.0
    %99 = vmatprep.subr.mxu0 0.0
    %100 = vmatpush2.msra.mxu0 0.0
    %101 = vmatprep.subr.mxu0 0.0
    %102 = vmatpush2.msra.mxu0 0.0
    %103 = vmatprep.subr.mxu0 0.0
    %104 = vmatpush2.msra.mxu0 0.0
    %105 = vmatprep.subr.mxu0 0.0
    %106 = vmatpush2.msra.mxu0 0.0
    %107 = vmatprep.subr.mxu0 0.0
    %108 = vmatpush2.msra.mxu0 0.0
    %109 = vmatprep.subr.mxu0 0.0
    %110 = vmatpush2.msra.mxu0 0.0
    %111 = vmatprep.subr.mxu0 0.0
    %112 = vmatpush2.msra.mxu0 0.0
    %113 = vmatprep.subr.mxu0 0.0
    %114 = vmatpush2.msra.mxu0 0.0
    %115 = vmatprep.subr.mxu0 0.0
    %116 = vmatpush2.msra.mxu0 0.0
    %117 = vmatprep.subr.mxu0 0.0
    %118 = vmatpush2.msra.mxu0 0.0
    %119 = vmatprep.subr.mxu0 0.0
    %120 = vmatpush2.msra.mxu0 0.0
    %121 = vmatprep.subr.mxu0 0.0
    %122 = vmatpush2.msra.mxu0 0.0
    %123 = vmatprep.subr.mxu0 0.0
    %124 = vmatpush2.msra.mxu0 0.0
    %125 = vmatprep.mubr.f32.mxu0 0.0
    %126 = vmatmul.mubr.f32.gmra.mxu0 %v44
    %v127 = vpop.f32.mrf.mxu0
    %v128 = vadd.f32 0.0, %v127
    %v129 = vpop.f32.mrf.mxu0
    %130 = vdwg.mxu0
    %v131 = vadd.f32 %v43, %v128
    %132 = vst [vmem:[#allocation7] sm:$0xff] %v131
    // Predicated region
    $region22: #{tpu_custom_call.1} parent=1 // pred_check
      _
    $region23: #{tpu_custom_call.1} parent=1 // pred_check_branch
      %134 = sbr.rel (0) target = $region25
    $region24: #{tpu_custom_call.1} parent=1 // pred_region
      %s136 = ssub.s32 128, 128
      %137 = vsyncadd [#allocation4], %s136
      %s139 = sshll.u32 [#allocation7], 4
      %s140 = int_to_ptr.vmem [resolvable:$true] %s139
      %142 = dma.vmem_to_hbm [thread:$0]  %s140, 128, %s2, [#allocation4]
    $region25: #{tpu_custom_call.1} parent=1 // pred_fallthru
      _
    // Predicated region
    $region26: #{tpu_custom_call.1} parent=1 // pred_check
      _
    $region27: #{tpu_custom_call.1} parent=1 // pred_check_branch
      %144 = sbr.rel (0) target = $region29
    $region28: #{tpu_custom_call.1} parent=1 // pred_region
      %145 = dma.done [#allocation4], 128
    $region29: #{tpu_custom_call.1} parent=1 // pred_fallthru
      _
    %146 = vsyncpa [#allocation3], 1
    %147 = vsyncpa [#allocation6], 1
    %148 = vsyncpa [#allocation4], 1

</llo_original>
